<compile_context>
chip_gen: v5e
topology: v5e:2x2
jax: 0.10.0
libtpu: 0.0.40
codegen_flags: <defaults>
</compile_context>

<pallas_src>
import jax
import jax.numpy as jnp
from jax.experimental import pallas as pl
from jax.experimental.pallas import tpu as pltpu

# ---- problem sizes (small, consistent with the module) -----------------------
B = 2            # batch
S = 16           # max_seq_len (multiple of 8 for AvgPool1d(8, 8))
D_MODEL = 32     # transformer hidden size at the hook point
D_SAE = 64       # sae.cfg.d_sae
NUM_CLASSES = 4
POOL = 8                     # AvgPool1d kernel_size = stride = 8
SEQ_POOL = S // POOL         # seq_len = max_seq_len / 8
C_PAD = 128                  # classes padded to a lane-dense output block


def sae_classifier_kernel(h_ref, m_ref, w_enc_ref, b_eff_ref, w_fc_ref, o_ref):
    # h_ref:     (B*S, D_MODEL)
    # m_ref:     (B*S, 1)                 attention mask, lane-broadcast over d_sae
    # w_enc_ref: (D_MODEL, D_SAE)
    # b_eff_ref: (1, D_SAE)               b_enc - b_dec @ W_enc  (b_dec folded away)
    # w_fc_ref:  (SEQ_POOL, D_SAE, C_PAD) fc1 weight with 1/POOL folded in, padded
    # o_ref:     (B, C_PAD)               lane-dense logits block
    pre = jnp.dot(h_ref[...], w_enc_ref[...],
                  preferred_element_type=jnp.float32)              # one MXU push
    feats = jnp.maximum(pre + b_eff_ref[...], 0.0) * m_ref[...]    # (B*S, D_SAE)

    # Leading-dim split only (last dim unchanged, sublane split at multiple of 8)
    feats3 = feats.reshape(B, S, D_SAE)                            # (B, S, D_SAE)

    # Fused AvgPool1d(8,8) + flatten + fc1: 1/POOL lives in w_fc_ref, so the pool
    # is a plain group-sum over sublanes followed by one matmul per seq group.
    acc = jnp.zeros((B, C_PAD), jnp.float32)
    for g in range(SEQ_POOL):                                      # static, 2 iters
        pooled = jnp.sum(feats3[:, g * POOL:(g + 1) * POOL, :], axis=1)  # (B, D_SAE)
        acc = acc + jnp.dot(pooled, w_fc_ref[g],
                            preferred_element_type=jnp.float32)
    o_ref[...] = acc


def prepare_params(w_enc, b_enc, b_dec, fc1_weight):
    """One-time parameter transforms (outside the kernel hot path)."""
    # Fold the SAE pre-bias into the encoder bias (exact algebraic identity).
    b_eff = b_enc - b_dec @ w_enc                                   # (1, D_SAE)
    # fc1.weight is (NUM_CLASSES, SEQ_POOL*D_SAE) with flatten order g*D_SAE + d.
    # Fold AvgPool's 1/POOL, reorder to (SEQ_POOL, D_SAE, C), zero-pad classes
    # to a lane-dense width of C_PAD.
    w_fc = fc1_weight.reshape(NUM_CLASSES, SEQ_POOL, D_SAE)
    w_fc = jnp.transpose(w_fc, (1, 2, 0)) / POOL                    # (SEQ_POOL, D_SAE, C)
    w_fc = jnp.pad(w_fc, ((0, 0), (0, 0), (0, C_PAD - NUM_CLASSES)))
    return w_enc, b_eff, w_fc


def sae_classifier_forward(hidden_states, attention_mask, w_enc, b_eff, w_fc_k):
    """hidden_states: (B, S, D_MODEL) f32, attention_mask: (B, S)."""
    h2 = hidden_states.reshape(B * S, D_MODEL)                      # free XLA reshape
    m2 = attention_mask.astype(hidden_states.dtype).reshape(B * S, 1)
    out = pl.pallas_call(
        sae_classifier_kernel,
        out_shape=jax.ShapeDtypeStruct((B, C_PAD), jnp.float32),
        grid=(1,),                                                  # single step
        in_specs=[
            pl.BlockSpec((B * S, D_MODEL), lambda i: (0, 0)),
            pl.BlockSpec((B * S, 1), lambda i: (0, 0)),
            pl.BlockSpec((D_MODEL, D_SAE), lambda i: (0, 0)),
            pl.BlockSpec((1, D_SAE), lambda i: (0, 0)),
            pl.BlockSpec((SEQ_POOL, D_SAE, C_PAD), lambda i: (0, 0, 0)),
        ],
        out_specs=pl.BlockSpec((B, C_PAD), lambda i: (0, 0)),
        compiler_params=pltpu.CompilerParams(
            dimension_semantics=("arbitrary",)),                    # no cross-TC split
    )(h2, m2, w_enc, b_eff, w_fc_k)
    return out[:, :NUM_CLASSES]                                     # (B, NUM_CLASSES)


def reference_forward(hidden_states, attention_mask, w_enc, b_enc, b_dec, fc1_weight):
    """Pure-JAX mirror of the PyTorch forward (eval mode), original params."""
    feats = jnp.maximum((hidden_states - b_dec) @ w_enc + b_enc, 0.0)
    feats = feats * attention_mask.astype(feats.dtype)[:, :, None]
    pooled = feats.reshape(B, SEQ_POOL, POOL, D_SAE).mean(axis=2)   # AvgPool1d(8,8)
    flat = pooled.reshape(B, SEQ_POOL * D_SAE)                      # view(B, -1)
    return flat @ fc1_weight.T                                      # fc1, bias=False


if __name__ == "__main__":
    key = jax.random.PRNGKey(0)
    k_h, k_we, k_be, k_bd, k_fc = jax.random.split(key, 5)

    hidden_states = jax.random.normal(k_h, (B, S, D_MODEL), jnp.float32)
    # attention mask: first row masks out the tail, second row fully attended
    attention_mask = jnp.concatenate(
        [jnp.concatenate([jnp.ones((1, S - 4)), jnp.zeros((1, 4))], axis=1),
         jnp.ones((1, S))], axis=0).astype(jnp.float32)              # (B, S)

    # deterministic synthetic parameters (shapes from the module __init__)
    w_enc = jax.random.normal(k_we, (D_MODEL, D_SAE), jnp.float32) * 0.05
    b_enc = jax.random.normal(k_be, (1, D_SAE), jnp.float32) * 0.05
    b_dec = jax.random.normal(k_bd, (1, D_MODEL), jnp.float32) * 0.05
    # fc1.weight in torch layout: (num_classes, d_sae * seq_len)
    fc1_weight = jax.random.normal(
        k_fc, (NUM_CLASSES, SEQ_POOL * D_SAE), jnp.float32) * 0.05

    w_enc_k, b_eff_k, w_fc_k = prepare_params(w_enc, b_enc, b_dec, fc1_weight)
    out = sae_classifier_forward(hidden_states, attention_mask,
                                 w_enc_k, b_eff_k, w_fc_k)
    jax.block_until_ready(out)

    ref = reference_forward(hidden_states, attention_mask,
                            w_enc, b_enc, b_dec, fc1_weight)
    assert out.shape == (B, NUM_CLASSES)
    assert jnp.allclose(out, ref, atol=1e-4, rtol=1e-4), (out, ref)
    print("KERNEL_OK")
</pallas_src>

<mosaic_0001>
module attributes {stable_mosaic.version = 11 : i64} {
  func.func @sae_classifier_kernel(%arg0: i32, %arg1: memref<32x32xf32, #tpu.memory_space<vmem>>, %arg2: memref<32x1xf32, #tpu.memory_space<vmem>>, %arg3: memref<32x64xf32, #tpu.memory_space<vmem>>, %arg4: memref<1x64xf32, #tpu.memory_space<vmem>>, %arg5: memref<2x64x128xf32, #tpu.memory_space<vmem>>, %arg6: memref<2x128xf32, #tpu.memory_space<vmem>>) attributes {dimension_semantics = [#tpu.dimension_semantics<arbitrary>], iteration_bounds = array<i64: 1>, scalar_prefetch = 0 : i64, scratch_operands = 0 : i64, tpu.core_type = #tpu.core_type<tc>, window_params = [{pipeline_mode = #tpu.pipeline_mode<synchronous>, transform_indices = @transform_0, window_bounds = array<i64: 32, 32>}, {pipeline_mode = #tpu.pipeline_mode<synchronous>, transform_indices = @transform_1, window_bounds = array<i64: 32, 1>}, {pipeline_mode = #tpu.pipeline_mode<synchronous>, transform_indices = @transform_2, window_bounds = array<i64: 32, 64>}, {pipeline_mode = #tpu.pipeline_mode<synchronous>, transform_indices = @transform_3, window_bounds = array<i64: 1, 64>}, {pipeline_mode = #tpu.pipeline_mode<synchronous>, transform_indices = @transform_4, window_bounds = array<i64: 2, 64, 128>}, {pipeline_mode = #tpu.pipeline_mode<synchronous>, transform_indices = @transform_5, window_bounds = array<i64: 2, 128>}]} {
    %c0 = arith.constant 0 : index
    %c0_0 = arith.constant 0 : index
    %0 = vector.load %arg1[%c0, %c0_0] : memref<32x32xf32, #tpu.memory_space<vmem>>, vector<32x32xf32>
    %c0_1 = arith.constant 0 : index
    %c0_2 = arith.constant 0 : index
    %1 = vector.load %arg3[%c0_1, %c0_2] : memref<32x64xf32, #tpu.memory_space<vmem>>, vector<32x64xf32>
    %cst = arith.constant dense<0.000000e+00> : vector<32x64xf32>
    %2 = tpu.matmul %0, %1, %cst {dimension_numbers = #tpu.dot_dimension_numbers<[1], [0], [0], [1], [0, 0, 1, 1], [], []>} : vector<32x32xf32>, vector<32x64xf32>, vector<32x64xf32> -> vector<32x64xf32>
    %c0_3 = arith.constant 0 : index
    %c0_4 = arith.constant 0 : index
    %3 = vector.load %arg4[%c0_3, %c0_4] : memref<1x64xf32, #tpu.memory_space<vmem>>, vector<1x64xf32>
    %4 = vector.broadcast %3 : vector<1x64xf32> to vector<32x64xf32>
    %5 = arith.addf %2, %4 : vector<32x64xf32>
    %cst_5 = arith.constant 0.000000e+00 : f32
    %6 = vector.broadcast %cst_5 : f32 to vector<32x64xf32>
    %7 = arith.maximumf %5, %6 : vector<32x64xf32>
    %c0_6 = arith.constant 0 : index
    %c0_7 = arith.constant 0 : index
    %8 = vector.load %arg2[%c0_6, %c0_7] : memref<32x1xf32, #tpu.memory_space<vmem>>, vector<32x1xf32>
    %9 = vector.broadcast %8 : vector<32x1xf32> to vector<32x64xf32>
    %10 = arith.mulf %7, %9 : vector<32x64xf32>
    %11 = vector.shape_cast %10 : vector<32x64xf32> to vector<2x16x64xf32>
    %cst_8 = arith.constant 0.000000e+00 : f32
    %12 = vector.broadcast %cst_8 : f32 to vector<2x128xf32>
    %13 = vector.extract_strided_slice %11 {offsets = [0, 0, 0], sizes = [2, 8, 64], strides = [1, 1, 1]} : vector<2x16x64xf32> to vector<2x8x64xf32>
    %cst_9 = arith.constant dense<0.000000e+00> : vector<2x64xf32>
    %14 = vector.multi_reduction <add>, %13, %cst_9 [1] : vector<2x8x64xf32> to vector<2x64xf32>
    %c0_10 = arith.constant 0 : index
    %c0_11 = arith.constant 0 : index
    %c0_12 = arith.constant 0 : index
    %15 = vector.load %arg5[%c0_10, %c0_11, %c0_12] : memref<2x64x128xf32, #tpu.memory_space<vmem>>, vector<1x64x128xf32>
    %16 = vector.shape_cast %15 : vector<1x64x128xf32> to vector<64x128xf32>
    %cst_13 = arith.constant dense<0.000000e+00> : vector<2x128xf32>
    %17 = tpu.matmul %14, %16, %cst_13 {dimension_numbers = #tpu.dot_dimension_numbers<[1], [0], [0], [1], [0, 0, 1, 1], [], []>} : vector<2x64xf32>, vector<64x128xf32>, vector<2x128xf32> -> vector<2x128xf32>
    %18 = arith.addf %12, %17 : vector<2x128xf32>
    %19 = vector.extract_strided_slice %11 {offsets = [0, 8, 0], sizes = [2, 8, 64], strides = [1, 1, 1]} : vector<2x16x64xf32> to vector<2x8x64xf32>
    %cst_14 = arith.constant dense<0.000000e+00> : vector<2x64xf32>
    %20 = vector.multi_reduction <add>, %19, %cst_14 [1] : vector<2x8x64xf32> to vector<2x64xf32>
    %c1 = arith.constant 1 : index
    %c0_15 = arith.constant 0 : index
    %c0_16 = arith.constant 0 : index
    %21 = vector.load %arg5[%c1, %c0_15, %c0_16] : memref<2x64x128xf32, #tpu.memory_space<vmem>>, vector<1x64x128xf32>
    %22 = vector.shape_cast %21 : vector<1x64x128xf32> to vector<64x128xf32>
    %cst_17 = arith.constant dense<0.000000e+00> : vector<2x128xf32>
    %23 = tpu.matmul %20, %22, %cst_17 {dimension_numbers = #tpu.dot_dimension_numbers<[1], [0], [0], [1], [0, 0, 1, 1], [], []>} : vector<2x64xf32>, vector<64x128xf32>, vector<2x128xf32> -> vector<2x128xf32>
    %24 = arith.addf %18, %23 : vector<2x128xf32>
    %c0_18 = arith.constant 0 : index
    %c0_19 = arith.constant 0 : index
    %25 = vector.load %arg6[%c0_18, %c0_19] : memref<2x128xf32, #tpu.memory_space<vmem>>, vector<2x128xf32>
    tpu.vector_store %arg6[%c0_18, %c0_19], %24 {strides = array<i32>} : memref<2x128xf32, #tpu.memory_space<vmem>>, vector<2x128xf32>,
    return
  }
  func.func @transform_0(%arg0: i32) -> (i32, i32) {
    %c0_i32 = arith.constant 0 : i32
    %c0_i32_0 = arith.constant 0 : i32
    %c0_i32_1 = arith.constant 0 : i32
    return %c0_i32, %c0_i32_0 : i32, i32
  }
  func.func @transform_1(%arg0: i32) -> (i32, i32) {
    %c0_i32 = arith.constant 0 : i32
    %c0_i32_0 = arith.constant 0 : i32
    %c0_i32_1 = arith.constant 0 : i32
    return %c0_i32, %c0_i32_0 : i32, i32
  }
  func.func @transform_2(%arg0: i32) -> (i32, i32) {
    %c0_i32 = arith.constant 0 : i32
    %c0_i32_0 = arith.constant 0 : i32
    %c0_i32_1 = arith.constant 0 : i32
    return %c0_i32, %c0_i32_0 : i32, i32
  }
  func.func @transform_3(%arg0: i32) -> (i32, i32) {
    %c0_i32 = arith.constant 0 : i32
    %c0_i32_0 = arith.constant 0 : i32
    %c0_i32_1 = arith.constant 0 : i32
    return %c0_i32, %c0_i32_0 : i32, i32
  }
  func.func @transform_4(%arg0: i32) -> (i32, i32, i32) {
    %c0_i32 = arith.constant 0 : i32
    %c0_i32_0 = arith.constant 0 : i32
    %c0_i32_1 = arith.constant 0 : i32
    %c0_i32_2 = arith.constant 0 : i32
    return %c0_i32, %c0_i32_0, %c0_i32_1 : i32, i32, i32
  }
  func.func @transform_5(%arg0: i32) -> (i32, i32) {
    %c0_i32 = arith.constant 0 : i32
    %c0_i32_0 = arith.constant 0 : i32
    %c0_i32_1 = arith.constant 0 : i32
    return %c0_i32, %c0_i32_0 : i32, i32
  }
}

</mosaic_0001>

<llo_original>
// kernel: tpu_custom_call.1
$region0: #{tpu_custom_call.1}
  #allocation0 [shape = 'u32[]', space=smem, size = 0x4, offset = 0x4, fixed_abs, tag = 'smem constant byte address 0x4 - core index']
  #allocation1 [shape = 'u32[72,128]{1,0:T(1,128)}', space=vmem, size = 0x9000, scoped, tag = 'internal scratch']
  %s0 = inlined_call_operand.vmem [shape: f32[32,32], index: 0, kind: input, shape index: {}]
  %s1 = inlined_call_operand.vmem [shape: f32[32,1], index: 1, kind: input, shape index: {}]
  %s2 = inlined_call_operand.hbm [shape: f32[32,64], index: 2, kind: input, shape index: {}]
  %s3 = inlined_call_operand.vmem [shape: f32[1,64], index: 3, kind: input, shape index: {}]
  %s4 = inlined_call_operand.hbm [shape: f32[2,64,128], index: 4, kind: input, shape index: {}]
  %s5 = inlined_call_operand.hbm [shape: f32[2,128], index: 5, kind: output, shape index: {}]
  %s6 = sld [smem:[#allocation0]]
  $region38: #{tpu_custom_call.1} parent=0
    _
  %s8 = ssub.s32 1, %s6
  %s9 = scalar_select 0, %s8, %s6
  $region1: #{tpu_custom_call.1} parent=0
    #allocation2 [shape = 'u8[16384]{0}', space=vmem, size = 0x4000, scoped, tag = 'input window, operand 2, single buffered']
    #allocation3 [shape = 's32[1]{0}', space=sflag, size = 0x4, scoped, tag = 'scoped memory for tpu_custom_call.1']
    #allocation4 [shape = 's32[1]{0}', space=sflag, size = 0x4, scoped, tag = 'scoped memory for tpu_custom_call.1']
    #allocation5 [shape = 'u8[65536]{0}', space=vmem, size = 0x10000, scoped, tag = 'input window, operand 4, single buffered']
    #allocation6 [shape = 's32[1]{0}', space=sflag, size = 0x4, scoped, tag = 'scoped memory for tpu_custom_call.1']
    #allocation7 [shape = 'u8[1024]{0}', space=vmem, size = 0x400, scoped, tag = 'output window, operand 0, single buffered']
    %10 = vsyncpa [#allocation3], 0
    %11 = vsyncpa [#allocation6], 0
    %12 = vsyncpa [#allocation4], 0
    // Predicated region
    $region2: #{tpu_custom_call.1} parent=1 // pred_check
      _
    $region3: #{tpu_custom_call.1} parent=1 // pred_check_branch
      %14 = sbr.rel (0) target = $region5
    $region4: #{tpu_custom_call.1} parent=1 // pred_region
      _
    $region5: #{tpu_custom_call.1} parent=1 // pred_fallthru
      _
    // Predicated region
    $region6: #{tpu_custom_call.1} parent=1 // pred_check
      _
    $region7: #{tpu_custom_call.1} parent=1 // pred_check_branch
      %16 = sbr.rel (0) target = $region9
    $region8: #{tpu_custom_call.1} parent=1 // pred_region
      _
    $region9: #{tpu_custom_call.1} parent=1 // pred_fallthru
      _
    // Predicated region
    $region10: #{tpu_custom_call.1} parent=1 // pred_check
      _
    $region11: #{tpu_custom_call.1} parent=1 // pred_check_branch
      %18 = sbr.rel (0) target = $region13
    $region12: #{tpu_custom_call.1} parent=1 // pred_region
      %20 = vsyncadd [#allocation3], 0
      %s21 = sshll.u32 %s2, 4
      %s22 = int_to_ptr.hbm [resolvable:$true] %s21
      %s23 = sshll.u32 [#allocation2], 4
      %s24 = int_to_ptr.vmem [resolvable:$true] %s23
      %29 = dma.hbm_to_vmem [thread:$0]  %s22, 512, %s24, [#allocation3], 128, 128, 8
    $region13: #{tpu_custom_call.1} parent=1 // pred_fallthru
      _
    // Predicated region
    $region14: #{tpu_custom_call.1} parent=1 // pred_check
      _
    $region15: #{tpu_custom_call.1} parent=1 // pred_check_branch
      %31 = sbr.rel (0) target = $region17
    $region16: #{tpu_custom_call.1} parent=1 // pred_region
      _
    $region17: #{tpu_custom_call.1} parent=1 // pred_fallthru
      _
    // Predicated region
    $region18: #{tpu_custom_call.1} parent=1 // pred_check
      _
    $region19: #{tpu_custom_call.1} parent=1 // pred_check_branch
      %33 = sbr.rel (0) target = $region21
    $region20: #{tpu_custom_call.1} parent=1 // pred_region
      %35 = vsyncadd [#allocation6], 0
      %s36 = sshll.u32 %s4, 4
      %s37 = int_to_ptr.hbm [resolvable:$true] %s36
      %s38 = sshll.u32 [#allocation5], 4
      %s39 = int_to_ptr.vmem [resolvable:$true] %s38
      %44 = dma.hbm_to_vmem [thread:$0]  %s37, 2048, %s39, [#allocation6], 128, 128, 8
    $region21: #{tpu_custom_call.1} parent=1 // pred_fallthru
      _
    // Predicated region
    $region22: #{tpu_custom_call.1} parent=1 // pred_check
      _
    $region23: #{tpu_custom_call.1} parent=1 // pred_check_branch
      %46 = sbr.rel (0) target = $region25
    $region24: #{tpu_custom_call.1} parent=1 // pred_region
      %48 = dma.done [#allocation3], 512
    $region25: #{tpu_custom_call.1} parent=1 // pred_fallthru
      _
    // Predicated region
    $region26: #{tpu_custom_call.1} parent=1 // pred_check
      _
    $region27: #{tpu_custom_call.1} parent=1 // pred_check_branch
      %50 = sbr.rel (0) target = $region29
    $region28: #{tpu_custom_call.1} parent=1 // pred_region
      %52 = dma.done [#allocation6], 2048
    $region29: #{tpu_custom_call.1} parent=1 // pred_fallthru
      _
    %v53 = vld [vmem:[%s0] sm:$0xff]
    %v54 = vld [vmem:[%s0 + $0x8] sm:$0xff]
    %v55 = vld [vmem:[%s0 + $0x10] sm:$0xff]
    %v56 = vld [vmem:[%s0 + $0x18] sm:$0xff]
    %v57 = vld [vmem:[#allocation2] sm:$0xff]
    %v58 = vld [vmem:[#allocation2 + $0x8] sm:$0xff]
    %v59 = vld [vmem:[#allocation2 + $0x10] sm:$0xff]
    %v60 = vld [vmem:[#allocation2 + $0x18] sm:$0xff]
    %v61 = vld [vmem:[%s3] sm:$0x1]
    %v63 = vperm.slane %v61, 0
    %vm65 = vcmask 261120
    %v67 = vsel %vm65, %v53, 0
    %v70 = vsel %vm65, %v54, 0
    %v73 = vsel %vm65, %v55, 0
    %v76 = vsel %vm65, %v56, 0
    %78 = vmatpush.msra.mxu0 0.0
    %79 = vmatpush.msra.mxu0 0.0
    %80 = vmatpush.msra.mxu0 0.0
    %81 = vmatpush.msra.mxu0 0.0
    %82 = vmatpush.msra.mxu0 0.0
    %83 = vmatpush.msra.mxu0 0.0
    %84 = vmatpush.msra.mxu0 0.0
    %85 = vmatpush.msra.mxu0 0.0
    %86 = vmatpush.msra.mxu0 0.0
    %87 = vmatpush.msra.mxu0 0.0
    %88 = vmatpush.msra.mxu0 0.0
    %89 = vmatpush.msra.mxu0 0.0
    %90 = vmatpush.msra.mxu0 %v60
    %91 = vmatpush.msra.mxu0 %v59
    %92 = vmatpush.msra.mxu0 %v58
    %93 = vmatpush.msra.mxu0 %v57
    %94 = vmatmul.f32.gmra.mxu0 %v67
    %v95 = vpop.f32.mrf.mxu0
    %v96 = vadd.f32 %v63, %v95
    %97 = vmatmul.f32.gmra.mxu0 %v70
    %v98 = vpop.f32.mrf.mxu0
    %v99 = vadd.f32 %v63, %v98
    %100 = vmatmul.f32.gmra.mxu0 %v73
    %v101 = vpop.f32.mrf.mxu0
    %v102 = vadd.f32 %v63, %v101
    %103 = vmatmul.f32.gmra.mxu0 %v76
    %v104 = vpop.f32.mrf.mxu0
    %v105 = vadd.f32 %v63, %v104
    %106 = vdwg.mxu0
    %v107 = vmax.f32 %v96, 0.0
    %v108 = vmax.f32 %v99, 0.0
    %v109 = vmax.f32 %v102, 0.0
    %v110 = vmax.f32 %v105, 0.0
    %v111 = vld [vmem:[%s1] sm:$0xff]
    %v112 = vld [vmem:[%s1 + $0x8] sm:$0xff]
    %v113 = vld [vmem:[%s1 + $0x10] sm:$0xff]
    %v114 = vld [vmem:[%s1 + $0x18] sm:$0xff]
    %116 = vset.pattern.permute.xlu0 0
    %117 = vperm.xlu0 %116, %v111
    %v118 = vpop.permute.xlu0 %117
    %121 = vset.pattern.permute.xlu0 0
    %122 = vperm.xlu0 %121, %v112
    %v123 = vpop.permute.xlu0 %122
    %126 = vset.pattern.permute.xlu0 0
    %127 = vperm.xlu0 %126, %v113
    %v128 = vpop.permute.xlu0 %127
    %131 = vset.pattern.permute.xlu0 0
    %132 = vperm.xlu0 %131, %v114
    %v133 = vpop.permute.xlu0 %132
    %v135 = vmul.f32 %v107, %v118
    %v136 = vmul.f32 %v108, %v123
    %v137 = vmul.f32 %v109, %v128
    %v138 = vmul.f32 %v110, %v133
    %vm139 = vcmask 523264
    %v140 = vsel %vm139, %v135, 0.0
    %v141 = vrot.slane %v140, 4
    %v142 = vadd.f32 %v140, %v141
    %v143 = vrot.slane %v142, 2
    %v144 = vadd.f32 %v142, %v143
    %v145 = vrot.slane %v144, 1
    %v146 = vadd.f32 %v144, %v145
    %v147 = vsel %vm139, %v137, 0.0
    %v148 = vrot.slane %v147, 4
    %v149 = vadd.f32 %v147, %v148
    %v150 = vrot.slane %v149, 2
    %v151 = vadd.f32 %v149, %v150
    %v152 = vrot.slane %v151, 1
    %v153 = vadd.f32 %v151, %v152
    %v154 = vld [vmem:[#allocation5] sm:$0xff]
    %v155 = vld [vmem:[#allocation5 + $0x8] sm:$0xff]
    %v156 = vld [vmem:[#allocation5 + $0x10] sm:$0xff]
    %v157 = vld [vmem:[#allocation5 + $0x18] sm:$0xff]
    %v158 = vld [vmem:[#allocation5 + $0x20] sm:$0xff]
    %v159 = vld [vmem:[#allocation5 + $0x28] sm:$0xff]
    %v160 = vld [vmem:[#allocation5 + $0x30] sm:$0xff]
    %v161 = vld [vmem:[#allocation5 + $0x38] sm:$0xff]
    %v162 = vsel %vm139, %v136, 0.0
    %v163 = vrot.slane %v162, 4
    %v164 = vadd.f32 %v162, %v163
    %v165 = vrot.slane %v164, 2
    %v166 = vadd.f32 %v164, %v165
    %v167 = vrot.slane %v166, 1
    %v168 = vadd.f32 %v166, %v167
    %v169 = vsel %vm139, %v138, 0.0
    %v170 = vrot.slane %v169, 4
    %v171 = vadd.f32 %v169, %v170
    %v172 = vrot.slane %v171, 2
    %v173 = vadd.f32 %v171, %v172
    %v174 = vrot.slane %v173, 1
    %v175 = vadd.f32 %v173, %v174
    %s176 = scalar_lea.vmem [#allocation5], 64
    %v177 = vld [vmem:[%s176] sm:$0xff]
    %v178 = vld [vmem:[%s176 + $0x8] sm:$0xff]
    %v179 = vld [vmem:[%s176 + $0x10] sm:$0xff]
    %v180 = vld [vmem:[%s176 + $0x18] sm:$0xff]
    %v181 = vld [vmem:[%s176 + $0x20] sm:$0xff]
    %v182 = vld [vmem:[%s176 + $0x28] sm:$0xff]
    %v183 = vld [vmem:[%s176 + $0x30] sm:$0xff]
    %v184 = vld [vmem:[%s176 + $0x38] sm:$0xff]
    %vm187 = vcmask 1041409
    %v188 = vsel %vm187, %v175, %v168
    %v189 = vsel %vm139, %v188, 0
    %191 = vmatpush.msra.mxu0 0.0
    %192 = vmatpush.msra.mxu0 0.0
    %193 = vmatpush.msra.mxu0 0.0
    %194 = vmatpush.msra.mxu0 0.0
    %195 = vmatpush.msra.mxu0 0.0
    %196 = vmatpush.msra.mxu0 0.0
    %197 = vmatpush.msra.mxu0 0.0
    %198 = vmatpush.msra.mxu0 0.0
    %199 = vmatpush.msra.mxu0 %v184
    %200 = vmatpush.msra.mxu0 %v183
    %201 = vmatpush.msra.mxu0 %v182
    %202 = vmatpush.msra.mxu0 %v181
    %203 = vmatpush.msra.mxu0 %v180
    %204 = vmatpush.msra.mxu0 %v179
    %205 = vmatpush.msra.mxu0 %v178
    %206 = vmatpush.msra.mxu0 %v177
    %207 = vmatmul.f32.gmra.mxu0 %v189
    %v208 = vpop.f32.mrf.mxu0
    %v209 = vadd.f32 0.0, %v208
    %210 = vdwg.mxu0
    %v213 = vsel %vm187, %v153, %v146
    %v214 = vsel %vm139, %v213, 0
    %216 = vmatpush.msra.mxu0 0.0
    %217 = vmatpush.msra.mxu0 0.0
    %218 = vmatpush.msra.mxu0 0.0
    %219 = vmatpush.msra.mxu0 0.0
    %220 = vmatpush.msra.mxu0 0.0
    %221 = vmatpush.msra.mxu0 0.0
    %222 = vmatpush.msra.mxu0 0.0
    %223 = vmatpush.msra.mxu0 0.0
    %224 = vmatpush.msra.mxu0 %v161
    %225 = vmatpush.msra.mxu0 %v160
    %226 = vmatpush.msra.mxu0 %v159
    %227 = vmatpush.msra.mxu0 %v158
    %228 = vmatpush.msra.mxu0 %v157
    %229 = vmatpush.msra.mxu0 %v156
    %230 = vmatpush.msra.mxu0 %v155
    %231 = vmatpush.msra.mxu0 %v154
    %232 = vmatmul.f32.gmra.mxu0 %v214
    %v233 = vpop.f32.mrf.mxu0
    %v234 = vadd.f32 %v209, %v233
    %235 = vdwg.mxu0
    %236 = vst [vmem:[#allocation7] sm:$0x3] %v234
    // Predicated region
    $region30: #{tpu_custom_call.1} parent=1 // pred_check
      _
    $region31: #{tpu_custom_call.1} parent=1 // pred_check_branch
      %238 = sbr.rel (0) target = $region33
    $region32: #{tpu_custom_call.1} parent=1 // pred_region
      %240 = vsyncadd [#allocation4], 0
      %s242 = sshll.u32 [#allocation7], 4
      %s243 = int_to_ptr.vmem [resolvable:$true] %s242
      %s244 = sshll.u32 %s5, 4
      %s245 = int_to_ptr.hbm [resolvable:$true] %s244
      %247 = dma.vmem_to_hbm [thread:$0]  %s243, 32, %s245, [#allocation4]
    $region33: #{tpu_custom_call.1} parent=1 // pred_fallthru
      _
    // Predicated region
    $region34: #{tpu_custom_call.1} parent=1 // pred_check
      _
    $region35: #{tpu_custom_call.1} parent=1 // pred_check_branch
      %249 = sbr.rel (0) target = $region37
    $region36: #{tpu_custom_call.1} parent=1 // pred_region
      %251 = dma.done [#allocation4], 32
    $region37: #{tpu_custom_call.1} parent=1 // pred_fallthru
      _
    %252 = vsyncpa [#allocation3], 1
    %253 = vsyncpa [#allocation6], 1
    %254 = vsyncpa [#allocation4], 1

</llo_original>
